<compile_context>
chip_gen: v7x
topology: tpu7x:2x2x1
jax: 0.10.0
libtpu: 0.0.40
codegen_flags: <defaults>
</compile_context>

<pallas_src>
import jax
import jax.numpy as jnp
from jax.experimental import pallas as pl
from jax.experimental.pallas import tpu as pltpu


def qnetwork_kernel(x_ref, w1_ref, b1_ref, w2_ref, b2_ref, w3_ref, b3_ref, oT_ref):
    """One batch tile of the fused 3-layer MLP.

    x_ref arrives in natural (batch, feat) layout; all activations are kept in the
    lane-dense transposed (feat, batch) layout so bias+ReLU use full VPU width and
    the output store is a dense, unmasked lane-major store.
    """
    x = x_ref[...]  # (block_n, d_in), natural layout, f32
    # h1T[h, n] = sum_i w1[h, i] * x[n, i]  -> (h1, block_n); MXU handles the
    # transposed-RHS contraction natively (no materialized transpose of x).
    h1 = jax.lax.dot_general(
        w1_ref[...], x, (((1,), (1,)), ((), ())),
        preferred_element_type=jnp.float32) + b1_ref[...]
    h1 = jnp.maximum(h1, 0.0)
    h2 = jnp.dot(w2_ref[...], h1, preferred_element_type=jnp.float32) + b2_ref[...]
    h2 = jnp.maximum(h2, 0.0)
    h3 = jnp.dot(w3_ref[...], h2, preferred_element_type=jnp.float32) + b3_ref[...]
    oT_ref[...] = h3.astype(oT_ref.dtype)


def qnetwork_forward(state, params, *, block_n=32768):
    """state: (N, input_dim) -> (N, output_dim), matching the torch module.

    params follow torch.nn.Linear layout: weights (out_dim, in_dim), biases (out_dim, 1).
    block_n: batch rows per grid step (multiple of 128). Default 32768 targets the
    16K-64K sweet spot from the review; it is clamped to N for small batches.
    """
    w1, b1, w2, b2, w3, b3 = params
    state = jnp.asarray(state, jnp.float32)
    w1, b1, w2, b2, w3, b3 = (jnp.asarray(a, jnp.float32) for a in (w1, b1, w2, b2, w3, b3))

    n, d_in = state.shape
    h1d, h2d, d_out = w1.shape[0], w2.shape[0], w3.shape[0]

    if n <= block_n:
        bn = n                      # single full-extent block; no padding needed
    else:
        assert block_n % 128 == 0, "block_n must be a multiple of the 128-lane width"
        bn = block_n
    grid = (pl.cdiv(n, bn),)        # ragged last tile: OOB cols only feed dropped outputs

    weight_bytes = 4 * int(w1.size + b1.size + w2.size + b2.size + w3.size + b3.size)
    cost = pl.CostEstimate(
        flops=2 * n * (d_in * h1d + h1d * h2d + h2d * d_out),
        transcendentals=0,
        bytes_accessed=n * 4 * (d_in + d_out) + weight_bytes,
    )

    def resident(arr):
        # Constant block index -> fetched once, stays VMEM-resident across all steps.
        return pl.BlockSpec(arr.shape, lambda i: (0, 0))

    outT = pl.pallas_call(
        qnetwork_kernel,
        out_shape=jax.ShapeDtypeStruct((d_out, n), jnp.float32),
        grid=grid,
        in_specs=[
            pl.BlockSpec((bn, d_in), lambda i: (i, 0)),  # streamed natural-layout batch tiles
            resident(w1), resident(b1),
            resident(w2), resident(b2),
            resident(w3), resident(b3),
        ],
        out_specs=pl.BlockSpec((d_out, bn), lambda i: (0, i)),
        compiler_params=pltpu.CompilerParams(dimension_semantics=("parallel",)),
        cost_estimate=cost,
    )(state, w1, b1, w2, b2, w3, b3)

    # Single small-stream transpose back to the module's (N, d_out) contract.
    return outT.T


def init_qnetwork_params(key, input_dim=12, output_dim=4, hidden_dim_1=16, hidden_dim_2=16):
    """torch.nn.Linear-style init: W (out, in), b (out, 1), uniform(+-1/sqrt(fan_in))."""
    def linear_init(k, fan_in, fan_out):
        kw, kb = jax.random.split(k)
        bound = 1.0 / float(fan_in) ** 0.5
        w = jax.random.uniform(kw, (fan_out, fan_in), jnp.float32, -bound, bound)
        b = jax.random.uniform(kb, (fan_out, 1), jnp.float32, -bound, bound)
        return w, b

    k1, k2, k3 = jax.random.split(key, 3)
    w1, b1 = linear_init(k1, input_dim, hidden_dim_1)
    w2, b2 = linear_init(k2, hidden_dim_1, hidden_dim_2)
    w3, b3 = linear_init(k3, hidden_dim_2, output_dim)
    return (w1, b1, w2, b2, w3, b3)


def qnetwork_reference(state, params):
    """Pure-JAX reference implementation of the torch forward pass."""
    w1, b1, w2, b2, w3, b3 = params
    x1 = jnp.maximum(state @ w1.T + b1[:, 0], 0.0)
    x2 = jnp.maximum(x1 @ w2.T + b2[:, 0], 0.0)
    return x2 @ w3.T + b3[:, 0]


if __name__ == "__main__":
    key = jax.random.PRNGKey(0)
    k_params, k_small, k_big = jax.random.split(key, 3)

    input_dim, output_dim, hidden_1, hidden_2 = 12, 4, 16, 16
    params = init_qnetwork_params(k_params, input_dim, output_dim, hidden_1, hidden_2)

    # Small batch (typical single-env step): single full-extent block.
    state_small = jax.random.normal(k_small, (8, input_dim), dtype=jnp.float32)
    q_small = jax.block_until_ready(qnetwork_forward(state_small, params))
    assert q_small.shape == (8, output_dim)
    assert jnp.allclose(q_small, qnetwork_reference(state_small, params), atol=1e-4, rtol=1e-4), \
        "small-batch mismatch vs reference"

    # Multi-step grid with a ragged last tile (no explicit padding anywhere).
    state_big = jax.random.normal(k_big, (300, input_dim), dtype=jnp.float32)
    q_big = jax.block_until_ready(qnetwork_forward(state_big, params, block_n=128))
    assert q_big.shape == (300, output_dim)
    assert jnp.allclose(q_big, qnetwork_reference(state_big, params), atol=1e-4, rtol=1e-4), \
        "multi-tile mismatch vs reference"

    # Default (large-tile) configuration on the same data: tile clamps to the batch.
    q_def = jax.block_until_ready(qnetwork_forward(state_big, params))
    assert jnp.allclose(q_def, qnetwork_reference(state_big, params), atol=1e-4, rtol=1e-4), \
        "default-tile mismatch vs reference"

    print("KERNEL_OK")
</pallas_src>

<mosaic_0001>
module attributes {stable_mosaic.version = 11 : i64} {
  func.func @qnetwork_kernel(%arg0: i32, %arg1: memref<8x12xf32, #tpu.memory_space<vmem>>, %arg2: memref<16x12xf32, #tpu.memory_space<vmem>>, %arg3: memref<16x1xf32, #tpu.memory_space<vmem>>, %arg4: memref<16x16xf32, #tpu.memory_space<vmem>>, %arg5: memref<16x1xf32, #tpu.memory_space<vmem>>, %arg6: memref<4x16xf32, #tpu.memory_space<vmem>>, %arg7: memref<4x1xf32, #tpu.memory_space<vmem>>, %arg8: memref<4x8xf32, #tpu.memory_space<vmem>>) attributes {dimension_semantics = [#tpu.dimension_semantics<parallel>], iteration_bounds = array<i64: 1>, scalar_prefetch = 0 : i64, scratch_operands = 0 : i64, tpu.core_type = #tpu.core_type<tc>, window_params = [{transform_indices = @transform_0, window_bounds = array<i64: 8, 12>}, {pipeline_mode = #tpu.pipeline_mode<synchronous>, transform_indices = @transform_1, window_bounds = array<i64: 16, 12>}, {pipeline_mode = #tpu.pipeline_mode<synchronous>, transform_indices = @transform_2, window_bounds = array<i64: 16, 1>}, {pipeline_mode = #tpu.pipeline_mode<synchronous>, transform_indices = @transform_3, window_bounds = array<i64: 16, 16>}, {pipeline_mode = #tpu.pipeline_mode<synchronous>, transform_indices = @transform_4, window_bounds = array<i64: 16, 1>}, {pipeline_mode = #tpu.pipeline_mode<synchronous>, transform_indices = @transform_5, window_bounds = array<i64: 4, 16>}, {pipeline_mode = #tpu.pipeline_mode<synchronous>, transform_indices = @transform_6, window_bounds = array<i64: 4, 1>}, {transform_indices = @transform_7, window_bounds = array<i64: 4, 8>}]} {
    %c0 = arith.constant 0 : index
    %c0_0 = arith.constant 0 : index
    %0 = vector.load %arg1[%c0, %c0_0] : memref<8x12xf32, #tpu.memory_space<vmem>>, vector<8x12xf32>
    %c0_1 = arith.constant 0 : index
    %c0_2 = arith.constant 0 : index
    %1 = vector.load %arg2[%c0_1, %c0_2] : memref<16x12xf32, #tpu.memory_space<vmem>>, vector<16x12xf32>
    %cst = arith.constant dense<0.000000e+00> : vector<16x8xf32>
    %2 = tpu.matmul %1, %0, %cst {dimension_numbers = #tpu.dot_dimension_numbers<[1], [1], [0], [0], [0, 0, 1, 0], [], []>} : vector<16x12xf32>, vector<8x12xf32>, vector<16x8xf32> -> vector<16x8xf32>
    %c0_3 = arith.constant 0 : index
    %c0_4 = arith.constant 0 : index
    %3 = vector.load %arg3[%c0_3, %c0_4] : memref<16x1xf32, #tpu.memory_space<vmem>>, vector<16x1xf32>
    %4 = vector.broadcast %3 : vector<16x1xf32> to vector<16x8xf32>
    %5 = arith.addf %2, %4 : vector<16x8xf32>
    %cst_5 = arith.constant 0.000000e+00 : f32
    %6 = vector.broadcast %cst_5 : f32 to vector<16x8xf32>
    %7 = arith.maximumf %5, %6 : vector<16x8xf32>
    %c0_6 = arith.constant 0 : index
    %c0_7 = arith.constant 0 : index
    %8 = vector.load %arg4[%c0_6, %c0_7] : memref<16x16xf32, #tpu.memory_space<vmem>>, vector<16x16xf32>
    %cst_8 = arith.constant dense<0.000000e+00> : vector<16x8xf32>
    %9 = tpu.matmul %8, %7, %cst_8 {dimension_numbers = #tpu.dot_dimension_numbers<[1], [0], [0], [1], [0, 0, 1, 1], [], []>} : vector<16x16xf32>, vector<16x8xf32>, vector<16x8xf32> -> vector<16x8xf32>
    %c0_9 = arith.constant 0 : index
    %c0_10 = arith.constant 0 : index
    %10 = vector.load %arg5[%c0_9, %c0_10] : memref<16x1xf32, #tpu.memory_space<vmem>>, vector<16x1xf32>
    %11 = vector.broadcast %10 : vector<16x1xf32> to vector<16x8xf32>
    %12 = arith.addf %9, %11 : vector<16x8xf32>
    %cst_11 = arith.constant 0.000000e+00 : f32
    %13 = vector.broadcast %cst_11 : f32 to vector<16x8xf32>
    %14 = arith.maximumf %12, %13 : vector<16x8xf32>
    %c0_12 = arith.constant 0 : index
    %c0_13 = arith.constant 0 : index
    %15 = vector.load %arg6[%c0_12, %c0_13] : memref<4x16xf32, #tpu.memory_space<vmem>>, vector<4x16xf32>
    %cst_14 = arith.constant dense<0.000000e+00> : vector<4x8xf32>
    %16 = tpu.matmul %15, %14, %cst_14 {dimension_numbers = #tpu.dot_dimension_numbers<[1], [0], [0], [1], [0, 0, 1, 1], [], []>} : vector<4x16xf32>, vector<16x8xf32>, vector<4x8xf32> -> vector<4x8xf32>
    %c0_15 = arith.constant 0 : index
    %c0_16 = arith.constant 0 : index
    %17 = vector.load %arg7[%c0_15, %c0_16] : memref<4x1xf32, #tpu.memory_space<vmem>>, vector<4x1xf32>
    %18 = vector.broadcast %17 : vector<4x1xf32> to vector<4x8xf32>
    %19 = arith.addf %16, %18 : vector<4x8xf32>
    %c0_17 = arith.constant 0 : index
    %c0_18 = arith.constant 0 : index
    %20 = vector.load %arg8[%c0_17, %c0_18] : memref<4x8xf32, #tpu.memory_space<vmem>>, vector<4x8xf32>
    tpu.vector_store %arg8[%c0_17, %c0_18], %19 {strides = array<i32>} : memref<4x8xf32, #tpu.memory_space<vmem>>, vector<4x8xf32>,
    return
  }
  func.func @transform_0(%arg0: i32) -> (i32, i32) {
    %c0_i32 = arith.constant 0 : i32
    %c0_i32_0 = arith.constant 0 : i32
    return %arg0, %c0_i32 : i32, i32
  }
  func.func @transform_1(%arg0: i32) -> (i32, i32) {
    %c0_i32 = arith.constant 0 : i32
    %c0_i32_0 = arith.constant 0 : i32
    %c0_i32_1 = arith.constant 0 : i32
    return %c0_i32, %c0_i32_0 : i32, i32
  }
  func.func @transform_2(%arg0: i32) -> (i32, i32) {
    %c0_i32 = arith.constant 0 : i32
    %c0_i32_0 = arith.constant 0 : i32
    %c0_i32_1 = arith.constant 0 : i32
    return %c0_i32, %c0_i32_0 : i32, i32
  }
  func.func @transform_3(%arg0: i32) -> (i32, i32) {
    %c0_i32 = arith.constant 0 : i32
    %c0_i32_0 = arith.constant 0 : i32
    %c0_i32_1 = arith.constant 0 : i32
    return %c0_i32, %c0_i32_0 : i32, i32
  }
  func.func @transform_4(%arg0: i32) -> (i32, i32) {
    %c0_i32 = arith.constant 0 : i32
    %c0_i32_0 = arith.constant 0 : i32
    %c0_i32_1 = arith.constant 0 : i32
    return %c0_i32, %c0_i32_0 : i32, i32
  }
  func.func @transform_5(%arg0: i32) -> (i32, i32) {
    %c0_i32 = arith.constant 0 : i32
    %c0_i32_0 = arith.constant 0 : i32
    %c0_i32_1 = arith.constant 0 : i32
    return %c0_i32, %c0_i32_0 : i32, i32
  }
  func.func @transform_6(%arg0: i32) -> (i32, i32) {
    %c0_i32 = arith.constant 0 : i32
    %c0_i32_0 = arith.constant 0 : i32
    %c0_i32_1 = arith.constant 0 : i32
    return %c0_i32, %c0_i32_0 : i32, i32
  }
  func.func @transform_7(%arg0: i32) -> (i32, i32) {
    %c0_i32 = arith.constant 0 : i32
    %c0_i32_0 = arith.constant 0 : i32
    return %c0_i32, %arg0 : i32, i32
  }
}

</mosaic_0001>

<llo_original>
// kernel: tpu_custom_call.1
$region0: #{tpu_custom_call.1}
  #allocation0 [shape = 'u32[]', space=smem, size = 0x4, offset = 0x4, fixed_abs, tag = 'smem constant byte address 0x4 - core index']
  #allocation1 [shape = 'u32[144,128]{1,0:T(1,128)}', space=vmem, size = 0x12000, scoped, tag = 'internal scratch']
  %s0 = inlined_call_operand.hbm [shape: f32[8,12], index: 0, kind: input, shape index: {}]
  %s1 = inlined_call_operand.vmem [shape: f32[16,12], index: 1, kind: input, shape index: {}]
  %s2 = inlined_call_operand.vmem [shape: f32[16,1], index: 2, kind: input, shape index: {}]
  %s3 = inlined_call_operand.vmem [shape: f32[16,16], index: 3, kind: input, shape index: {}]
  %s4 = inlined_call_operand.vmem [shape: f32[16,1], index: 4, kind: input, shape index: {}]
  %s5 = inlined_call_operand.vmem [shape: f32[4,16], index: 5, kind: input, shape index: {}]
  %s6 = inlined_call_operand.vmem [shape: f32[4,1], index: 6, kind: input, shape index: {}]
  %s7 = inlined_call_operand.hbm [shape: f32[4,8], index: 7, kind: output, shape index: {}]
  %s8 = sld [smem:[#allocation0]]
  $region42: #{tpu_custom_call.1} parent=0
    _
  %s10 = ssub.s32 1, %s8
  %s11 = scalar_select 0, %s10, %s8
  $region1: #{tpu_custom_call.1} parent=0
    #allocation2 [shape = 'u8[4096]{0}', space=vmem, size = 0x1000, scoped, tag = 'input window, operand 0, single buffered']
    #allocation3 [shape = 's32[1]{0}', space=sflag, size = 0x4, scoped, tag = 'scoped memory for tpu_custom_call.1']
    #allocation4 [shape = 's32[1]{0}', space=sflag, size = 0x4, scoped, tag = 'scoped memory for tpu_custom_call.1']
    #allocation5 [shape = 'u8[2048]{0}', space=vmem, size = 0x800, scoped, tag = 'output window, operand 0, single buffered']
    %12 = vsyncpa [#allocation3], 0
    %13 = vsyncpa [#allocation4], 0
    // Predicated region
    $region2: #{tpu_custom_call.1} parent=1 // pred_check
      _
    $region3: #{tpu_custom_call.1} parent=1 // pred_check_branch
      %15 = sbr.rel (0) target = $region5
    $region4: #{tpu_custom_call.1} parent=1 // pred_region
      %s17 = ssub.s32 128, 128
      %18 = vsyncadd [#allocation3], %s17
      %s20 = sshll.u32 [#allocation2], 4
      %s21 = int_to_ptr.vmem [resolvable:$true] %s20
      %23 = dma.hbm_to_vmem [thread:$0]  %s0, 128, %s21, [#allocation3]
    $region5: #{tpu_custom_call.1} parent=1 // pred_fallthru
      _
    // Predicated region
    $region6: #{tpu_custom_call.1} parent=1 // pred_check
      _
    $region7: #{tpu_custom_call.1} parent=1 // pred_check_branch
      %25 = sbr.rel (0) target = $region9
    $region8: #{tpu_custom_call.1} parent=1 // pred_region
      _
    $region9: #{tpu_custom_call.1} parent=1 // pred_fallthru
      _
    // Predicated region
    $region10: #{tpu_custom_call.1} parent=1 // pred_check
      _
    $region11: #{tpu_custom_call.1} parent=1 // pred_check_branch
      %27 = sbr.rel (0) target = $region13
    $region12: #{tpu_custom_call.1} parent=1 // pred_region
      _
    $region13: #{tpu_custom_call.1} parent=1 // pred_fallthru
      _
    // Predicated region
    $region14: #{tpu_custom_call.1} parent=1 // pred_check
      _
    $region15: #{tpu_custom_call.1} parent=1 // pred_check_branch
      %29 = sbr.rel (0) target = $region17
    $region16: #{tpu_custom_call.1} parent=1 // pred_region
      _
    $region17: #{tpu_custom_call.1} parent=1 // pred_fallthru
      _
    // Predicated region
    $region18: #{tpu_custom_call.1} parent=1 // pred_check
      _
    $region19: #{tpu_custom_call.1} parent=1 // pred_check_branch
      %31 = sbr.rel (0) target = $region21
    $region20: #{tpu_custom_call.1} parent=1 // pred_region
      _
    $region21: #{tpu_custom_call.1} parent=1 // pred_fallthru
      _
    // Predicated region
    $region22: #{tpu_custom_call.1} parent=1 // pred_check
      _
    $region23: #{tpu_custom_call.1} parent=1 // pred_check_branch
      %33 = sbr.rel (0) target = $region25
    $region24: #{tpu_custom_call.1} parent=1 // pred_region
      _
    $region25: #{tpu_custom_call.1} parent=1 // pred_fallthru
      _
    // Predicated region
    $region26: #{tpu_custom_call.1} parent=1 // pred_check
      _
    $region27: #{tpu_custom_call.1} parent=1 // pred_check_branch
      %35 = sbr.rel (0) target = $region29
    $region28: #{tpu_custom_call.1} parent=1 // pred_region
      _
    $region29: #{tpu_custom_call.1} parent=1 // pred_fallthru
      _
    // Predicated region
    $region30: #{tpu_custom_call.1} parent=1 // pred_check
      _
    $region31: #{tpu_custom_call.1} parent=1 // pred_check_branch
      %37 = sbr.rel (0) target = $region33
    $region32: #{tpu_custom_call.1} parent=1 // pred_region
      %38 = dma.done [#allocation3], 128
    $region33: #{tpu_custom_call.1} parent=1 // pred_fallthru
      _
    %v39 = vld [vmem:[#allocation2] sm:$0xff]
    %v40 = vld [vmem:[%s1] sm:$0xff]
    %v41 = vld [vmem:[%s1 + $0x8] sm:$0xff]
    %v42 = vld [vmem:[%s2] sm:$0xff]
    %v43 = vld [vmem:[%s2 + $0x8] sm:$0xff]
    %45 = vset.pattern.permute.xlu0 0
    %46 = vperm.xlu0 %45, %v42
    %v47 = vpop.permute.xlu0 %46
    %50 = vset.pattern.permute.xlu0 0
    %51 = vperm.xlu0 %50, %v43
    %v52 = vpop.permute.xlu0 %51
    %vm54 = vcmask 97280
    %v56 = vsel %vm54, %v40, 0
    %v59 = vsel %vm54, %v41, 0
    %v62 = vsel %vm54, %v39, 0
    %64 = vmatprep.subr.mxu0 0.0
    %65 = vmatpush1.xpose.msra.mxu0 %v62
    %66 = vmatprep.subr.mxu0 0.0
    %67 = vmatpush1.xpose.msra.mxu0 0.0
    %68 = vmatprep.subr.mxu0 0.0
    %69 = vmatpush1.xpose.msra.mxu0 0.0
    %70 = vmatprep.subr.mxu0 0.0
    %71 = vmatpush1.xpose.msra.mxu0 0.0
    %72 = vmatprep.subr.mxu0 0.0
    %73 = vmatpush1.xpose.msra.mxu0 0.0
    %74 = vmatprep.subr.mxu0 0.0
    %75 = vmatpush1.xpose.msra.mxu0 0.0
    %76 = vmatprep.subr.mxu0 0.0
    %77 = vmatpush1.xpose.msra.mxu0 0.0
    %78 = vmatprep.subr.mxu0 0.0
    %79 = vmatpush1.xpose.msra.mxu0 0.0
    %80 = vmatprep.subr.mxu0 0.0
    %81 = vmatpush1.xpose.msra.mxu0 0.0
    %82 = vmatprep.subr.mxu0 0.0
    %83 = vmatpush1.xpose.msra.mxu0 0.0
    %84 = vmatprep.subr.mxu0 0.0
    %85 = vmatpush1.xpose.msra.mxu0 0.0
    %86 = vmatprep.subr.mxu0 0.0
    %87 = vmatpush1.xpose.msra.mxu0 0.0
    %88 = vmatprep.subr.mxu0 0.0
    %89 = vmatpush1.xpose.msra.mxu0 0.0
    %90 = vmatprep.subr.mxu0 0.0
    %91 = vmatpush1.xpose.msra.mxu0 0.0
    %92 = vmatprep.subr.mxu0 0.0
    %93 = vmatpush1.xpose.msra.mxu0 0.0
    %94 = vmatprep.subr.mxu0 0.0
    %95 = vmatpush1.xpose.msra.mxu0 0.0
    %96 = vmatprep.subr.mxu0 0.0
    %97 = vmatpush1.xpose.msra.mxu0 0.0
    %98 = vmatprep.subr.mxu0 0.0
    %99 = vmatpush1.xpose.msra.mxu0 0.0
    %100 = vmatprep.subr.mxu0 0.0
    %101 = vmatpush1.xpose.msra.mxu0 0.0
    %102 = vmatprep.subr.mxu0 0.0
    %103 = vmatpush1.xpose.msra.mxu0 0.0
    %104 = vmatprep.subr.mxu0 0.0
    %105 = vmatpush1.xpose.msra.mxu0 0.0
    %106 = vmatprep.subr.mxu0 0.0
    %107 = vmatpush1.xpose.msra.mxu0 0.0
    %108 = vmatprep.subr.mxu0 0.0
    %109 = vmatpush1.xpose.msra.mxu0 0.0
    %110 = vmatprep.subr.mxu0 0.0
    %111 = vmatpush1.xpose.msra.mxu0 0.0
    %112 = vmatprep.subr.mxu0 0.0
    %113 = vmatpush1.xpose.msra.mxu0 0.0
    %114 = vmatprep.subr.mxu0 0.0
    %115 = vmatpush1.xpose.msra.mxu0 0.0
    %116 = vmatprep.subr.mxu0 0.0
    %117 = vmatpush1.xpose.msra.mxu0 0.0
    %118 = vmatprep.subr.mxu0 0.0
    %119 = vmatpush1.xpose.msra.mxu0 0.0
    %120 = vmatprep.subr.mxu0 0.0
    %121 = vmatpush1.xpose.msra.mxu0 0.0
    %122 = vmatprep.subr.mxu0 0.0
    %123 = vmatpush1.xpose.msra.mxu0 0.0
    %124 = vmatprep.subr.mxu0 0.0
    %125 = vmatpush1.xpose.msra.mxu0 0.0
    %126 = vmatprep.subr.mxu0 0.0
    %127 = vmatpush1.xpose.msra.mxu0 0.0
    %128 = vmatprep.mubr.f32.mxu0 0.0
    %129 = vmatmul.mubr.f32.gmra.mrb[0].mxu0 %v56
    %v130 = vpop.f32.mrb[0].mxu0
    %v131 = vadd.f32 %v47, %v130
    %v132 = vpop.f32.mrb[0].mxu0
    %133 = vmatprep.mubr.f32.mxu0 0.0
    %134 = vmatmul.mubr.f32.gmra.mrb[0].mxu0 %v59
    %v135 = vpop.f32.mrb[0].mxu0
    %v136 = vadd.f32 %v52, %v135
    %v137 = vpop.f32.mrb[0].mxu0
    %138 = vdwg.mxu0
    %v139 = vmax.f32 %v131, 0.0
    %v140 = vmax.f32 %v136, 0.0
    %v141 = vld [vmem:[%s3] sm:$0xff]
    %v142 = vld [vmem:[%s3 + $0x8] sm:$0xff]
    %v143 = vld [vmem:[%s4] sm:$0xff]
    %v144 = vld [vmem:[%s4 + $0x8] sm:$0xff]
    %146 = vset.pattern.permute.xlu0 0
    %147 = vperm.xlu0 %146, %v143
    %v148 = vpop.permute.xlu0 %147
    %151 = vset.pattern.permute.xlu0 0
    %152 = vperm.xlu0 %151, %v144
    %v153 = vpop.permute.xlu0 %152
    %vm155 = vcmask 130048
    %v157 = vsel %vm155, %v141, 0
    %v160 = vsel %vm155, %v142, 0
    %162 = vmatprep.subr.mxu0 0.0
    %163 = vmatpush1.msra.mxu0 %v139
    %164 = vmatprep.subr.mxu0 0.0
    %165 = vmatpush1.msra.mxu0 %v140
    %166 = vmatprep.subr.mxu0 0.0
    %167 = vmatpush1.msra.mxu0 0.0
    %168 = vmatprep.subr.mxu0 0.0
    %169 = vmatpush1.msra.mxu0 0.0
    %170 = vmatprep.subr.mxu0 0.0
    %171 = vmatpush1.msra.mxu0 0.0
    %172 = vmatprep.subr.mxu0 0.0
    %173 = vmatpush1.msra.mxu0 0.0
    %174 = vmatprep.subr.mxu0 0.0
    %175 = vmatpush1.msra.mxu0 0.0
    %176 = vmatprep.subr.mxu0 0.0
    %177 = vmatpush1.msra.mxu0 0.0
    %178 = vmatprep.subr.mxu0 0.0
    %179 = vmatpush1.msra.mxu0 0.0
    %180 = vmatprep.subr.mxu0 0.0
    %181 = vmatpush1.msra.mxu0 0.0
    %182 = vmatprep.subr.mxu0 0.0
    %183 = vmatpush1.msra.mxu0 0.0
    %184 = vmatprep.subr.mxu0 0.0
    %185 = vmatpush1.msra.mxu0 0.0
    %186 = vmatprep.subr.mxu0 0.0
    %187 = vmatpush1.msra.mxu0 0.0
    %188 = vmatprep.subr.mxu0 0.0
    %189 = vmatpush1.msra.mxu0 0.0
    %190 = vmatprep.subr.mxu0 0.0
    %191 = vmatpush1.msra.mxu0 0.0
    %192 = vmatprep.subr.mxu0 0.0
    %193 = vmatpush1.msra.mxu0 0.0
    %194 = vmatprep.subr.mxu0 0.0
    %195 = vmatpush1.msra.mxu0 0.0
    %196 = vmatprep.subr.mxu0 0.0
    %197 = vmatpush1.msra.mxu0 0.0
    %198 = vmatprep.subr.mxu0 0.0
    %199 = vmatpush1.msra.mxu0 0.0
    %200 = vmatprep.subr.mxu0 0.0
    %201 = vmatpush1.msra.mxu0 0.0
    %202 = vmatprep.subr.mxu0 0.0
    %203 = vmatpush1.msra.mxu0 0.0
    %204 = vmatprep.subr.mxu0 0.0
    %205 = vmatpush1.msra.mxu0 0.0
    %206 = vmatprep.subr.mxu0 0.0
    %207 = vmatpush1.msra.mxu0 0.0
    %208 = vmatprep.subr.mxu0 0.0
    %209 = vmatpush1.msra.mxu0 0.0
    %210 = vmatprep.subr.mxu0 0.0
    %211 = vmatpush1.msra.mxu0 0.0
    %212 = vmatprep.subr.mxu0 0.0
    %213 = vmatpush1.msra.mxu0 0.0
    %214 = vmatprep.subr.mxu0 0.0
    %215 = vmatpush1.msra.mxu0 0.0
    %216 = vmatprep.subr.mxu0 0.0
    %217 = vmatpush1.msra.mxu0 0.0
    %218 = vmatprep.subr.mxu0 0.0
    %219 = vmatpush1.msra.mxu0 0.0
    %220 = vmatprep.subr.mxu0 0.0
    %221 = vmatpush1.msra.mxu0 0.0
    %222 = vmatprep.subr.mxu0 0.0
    %223 = vmatpush1.msra.mxu0 0.0
    %224 = vmatprep.subr.mxu0 0.0
    %225 = vmatpush1.msra.mxu0 0.0
    %226 = vmatprep.mubr.f32.mxu0 0.0
    %227 = vmatmul.mubr.f32.gmra.mrb[0].mxu0 %v157
    %v228 = vpop.f32.mrb[0].mxu0
    %v229 = vadd.f32 %v148, %v228
    %v230 = vpop.f32.mrb[0].mxu0
    %231 = vmatprep.mubr.f32.mxu0 0.0
    %232 = vmatmul.mubr.f32.gmra.mrb[0].mxu0 %v160
    %v233 = vpop.f32.mrb[0].mxu0
    %v234 = vadd.f32 %v153, %v233
    %v235 = vpop.f32.mrb[0].mxu0
    %236 = vdwg.mxu0
    %v237 = vmax.f32 %v229, 0.0
    %v238 = vmax.f32 %v234, 0.0
    %v239 = vld [vmem:[%s5] sm:$0xf]
    %v240 = vld [vmem:[%s6] sm:$0xf]
    %242 = vset.pattern.permute.xlu0 0
    %243 = vperm.xlu0 %242, %v240
    %v244 = vpop.permute.xlu0 %243
    %v247 = vsel %vm155, %v239, 0
    %249 = vmatprep.subr.mxu0 0.0
    %250 = vmatpush1.msra.mxu0 %v237
    %251 = vmatprep.subr.mxu0 0.0
    %252 = vmatpush1.msra.mxu0 %v238
    %253 = vmatprep.subr.mxu0 0.0
    %254 = vmatpush1.msra.mxu0 0.0
    %255 = vmatprep.subr.mxu0 0.0
    %256 = vmatpush1.msra.mxu0 0.0
    %257 = vmatprep.subr.mxu0 0.0
    %258 = vmatpush1.msra.mxu0 0.0
    %259 = vmatprep.subr.mxu0 0.0
    %260 = vmatpush1.msra.mxu0 0.0
    %261 = vmatprep.subr.mxu0 0.0
    %262 = vmatpush1.msra.mxu0 0.0
    %263 = vmatprep.subr.mxu0 0.0
    %264 = vmatpush1.msra.mxu0 0.0
    %265 = vmatprep.subr.mxu0 0.0
    %266 = vmatpush1.msra.mxu0 0.0
    %267 = vmatprep.subr.mxu0 0.0
    %268 = vmatpush1.msra.mxu0 0.0
    %269 = vmatprep.subr.mxu0 0.0
    %270 = vmatpush1.msra.mxu0 0.0
    %271 = vmatprep.subr.mxu0 0.0
    %272 = vmatpush1.msra.mxu0 0.0
    %273 = vmatprep.subr.mxu0 0.0
    %274 = vmatpush1.msra.mxu0 0.0
    %275 = vmatprep.subr.mxu0 0.0
    %276 = vmatpush1.msra.mxu0 0.0
    %277 = vmatprep.subr.mxu0 0.0
    %278 = vmatpush1.msra.mxu0 0.0
    %279 = vmatprep.subr.mxu0 0.0
    %280 = vmatpush1.msra.mxu0 0.0
    %281 = vmatprep.subr.mxu0 0.0
    %282 = vmatpush1.msra.mxu0 0.0
    %283 = vmatprep.subr.mxu0 0.0
    %284 = vmatpush1.msra.mxu0 0.0
    %285 = vmatprep.subr.mxu0 0.0
    %286 = vmatpush1.msra.mxu0 0.0
    %287 = vmatprep.subr.mxu0 0.0
    %288 = vmatpush1.msra.mxu0 0.0
    %289 = vmatprep.subr.mxu0 0.0
    %290 = vmatpush1.msra.mxu0 0.0
    %291 = vmatprep.subr.mxu0 0.0
    %292 = vmatpush1.msra.mxu0 0.0
    %293 = vmatprep.subr.mxu0 0.0
    %294 = vmatpush1.msra.mxu0 0.0
    %295 = vmatprep.subr.mxu0 0.0
    %296 = vmatpush1.msra.mxu0 0.0
    %297 = vmatprep.subr.mxu0 0.0
    %298 = vmatpush1.msra.mxu0 0.0
    %299 = vmatprep.subr.mxu0 0.0
    %300 = vmatpush1.msra.mxu0 0.0
    %301 = vmatprep.subr.mxu0 0.0
    %302 = vmatpush1.msra.mxu0 0.0
    %303 = vmatprep.subr.mxu0 0.0
    %304 = vmatpush1.msra.mxu0 0.0
    %305 = vmatprep.subr.mxu0 0.0
    %306 = vmatpush1.msra.mxu0 0.0
    %307 = vmatprep.subr.mxu0 0.0
    %308 = vmatpush1.msra.mxu0 0.0
    %309 = vmatprep.subr.mxu0 0.0
    %310 = vmatpush1.msra.mxu0 0.0
    %311 = vmatprep.subr.mxu0 0.0
    %312 = vmatpush1.msra.mxu0 0.0
    %313 = vmatprep.mubr.f32.mxu0 0.0
    %314 = vmatmul.mubr.f32.gmra.mrb[0].mxu0 %v247
    %v315 = vpop.f32.mrb[0].mxu0
    %v316 = vadd.f32 %v244, %v315
    %v317 = vpop.f32.mrb[0].mxu0
    %318 = vdwg.mxu0
    %vm319 = vcmask 60416
    %320 = vst.msk [vmem:[#allocation5] sm:$0xf] %vm319, %v316
    // Predicated region
    $region34: #{tpu_custom_call.1} parent=1 // pred_check
      _
    $region35: #{tpu_custom_call.1} parent=1 // pred_check_branch
      %322 = sbr.rel (0) target = $region37
    $region36: #{tpu_custom_call.1} parent=1 // pred_region
      %s324 = ssub.s32 64, 64
      %325 = vsyncadd [#allocation4], %s324
      %s327 = sshll.u32 [#allocation5], 4
      %s328 = int_to_ptr.vmem [resolvable:$true] %s327
      %330 = dma.vmem_to_hbm [thread:$0]  %s328, 64, %s7, [#allocation4]
    $region37: #{tpu_custom_call.1} parent=1 // pred_fallthru
      _
    // Predicated region
    $region38: #{tpu_custom_call.1} parent=1 // pred_check
      _
    $region39: #{tpu_custom_call.1} parent=1 // pred_check_branch
      %332 = sbr.rel (0) target = $region41
    $region40: #{tpu_custom_call.1} parent=1 // pred_region
      %333 = dma.done [#allocation4], 64
    $region41: #{tpu_custom_call.1} parent=1 // pred_fallthru
      _
    %334 = vsyncpa [#allocation3], 1
    %335 = vsyncpa [#allocation4], 1

</llo_original>
